<compile_context>
chip_gen: v6e
topology: v6e:2x2x1
jax: 0.10.0
libtpu: 0.0.40
codegen_flags: <defaults>
</compile_context>

<pallas_src>
import numpy as np

import jax
import jax.numpy as jnp
from jax.experimental import pallas as pl
from jax.experimental.pallas import tpu as pltpu


# ----------------------------------------------------------------------------
# Bilinear weight matrices (align_corners=True), built on host at trace time.
# ----------------------------------------------------------------------------
def _bilinear_weight_matrix_np(out_size, in_size):
    """(out_size, in_size) row-stochastic bilinear weights, align_corners=True."""
    w = np.zeros((out_size, in_size), np.float32)
    if out_size == 1:
        src = np.zeros((1,), np.float64)
    else:
        src = np.arange(out_size, dtype=np.float64) * ((in_size - 1) / (out_size - 1))
    lo = np.clip(np.floor(src).astype(np.int64), 0, in_size - 1)
    hi = np.minimum(lo + 1, in_size - 1)
    frac = (src - lo).astype(np.float32)
    rows = np.arange(out_size)
    np.add.at(w, (rows, lo), 1.0 - frac)
    np.add.at(w, (rows, hi), frac)
    return w


# ----------------------------------------------------------------------------
# Pallas kernels
# ----------------------------------------------------------------------------
def _resize_kernel_merged(img_ref, wy_ref, wxT_ref, out_ref):
    """Resize P planes per grid step.

    img_ref : (P*H_in, W_in)   -- P planes flattened along the sublane-major axis
    wy_ref  : (H_out, H_in)    -- float32 bilinear weights (rows)
    wxT_ref : (W_in,  W_out)   -- float32 bilinear weights (cols), transposed
    out_ref : (P, H_out, W_out)
    """
    h_out, h_in = wy_ref.shape
    p = out_ref.shape[0]
    wy = wy_ref[...]
    # X-direction resize of all P planes in ONE big MXU matmul:
    #   M = P*H_in, K = W_in, N = W_out
    t = jnp.dot(img_ref[...], wxT_ref[...], preferred_element_type=jnp.float32)
    # Y-direction resize per plane (small static unroll, canonical 2-D matmuls).
    for i in range(p):
        out_ref[i] = jnp.dot(
            wy, t[i * h_in:(i + 1) * h_in, :],
            preferred_element_type=jnp.float32,
        ).astype(out_ref.dtype)


def _resize_kernel_per_plane(img_ref, wy_ref, wxT_ref, out_ref):
    """Fallback (used only when H_in is not a multiple of 8 and P < N).

    img_ref : (P, H_in, W_in);  out_ref : (P, H_out, W_out)
    """
    p = img_ref.shape[0]
    wy = wy_ref[...]
    wxT = wxT_ref[...]
    for i in range(p):
        t = jnp.dot(wy, img_ref[i], preferred_element_type=jnp.float32)
        out_ref[i] = jnp.dot(t, wxT, preferred_element_type=jnp.float32).astype(
            out_ref.dtype)


# ----------------------------------------------------------------------------
# Plane-batch selection (VMEM-budget aware; v7x has only 64 MiB VMEM per TC)
# ----------------------------------------------------------------------------
def _choose_plane_batch(n, h_in, w_in, h_out, w_out, itemsize,
                        budget_bytes, max_unroll=32):
    def fits(p):
        working = 2 * p * (h_in * w_in + h_out * w_out) * itemsize  # dbl-buffered I/O
        working += p * h_in * w_out * 4                              # f32 intermediate
        working += 2 * (h_out * h_in + w_in * w_out) * 4             # weight tiles
        return working <= budget_bytes

    cands = [p for p in range(1, min(n, max_unroll) + 1) if n % p == 0 and fits(p)]
    if not cands:
        return 1
    # Prefer >= 2 grid steps (pipelining + megacore sharding on v7x) when possible.
    multi_step = [p for p in cands if n // p >= 2]
    return max(multi_step) if multi_step else max(cands)


# ----------------------------------------------------------------------------
# Bilinear resize wrapper (all image planes of the forward pass in one call)
# ----------------------------------------------------------------------------
def interpolate2d_pallas(img, out_size, *, vmem_budget_bytes=24 << 20):
    """Bilinear (align_corners=True) resize of an NCHW image via a Pallas kernel."""
    b, c, h, w = img.shape
    out_h, out_w = int(out_size[0]), int(out_size[1])
    n = b * c

    # float32 weight matrices (kept f32 even for bf16 images for accuracy).
    wy = jnp.asarray(_bilinear_weight_matrix_np(out_h, h))        # (H_out, H_in)
    wxT = jnp.asarray(_bilinear_weight_matrix_np(out_w, w).T)     # (W_in,  W_out)

    itemsize = jnp.dtype(img.dtype).itemsize
    p = _choose_plane_batch(n, h, w, out_h, out_w, itemsize, vmem_budget_bytes)
    grid = (n // p,)

    out_shape = jax.ShapeDtypeStruct((n, out_h, out_w), img.dtype)
    out_spec = pl.BlockSpec((p, out_h, out_w), lambda i: (i, 0, 0))
    wy_spec = pl.BlockSpec((out_h, h), lambda i: (0, 0))
    wxT_spec = pl.BlockSpec((w, out_w), lambda i: (0, 0))

    compiler_params = pltpu.CompilerParams(
        dimension_semantics=("parallel",),
        vmem_limit_bytes=48 * 1024 * 1024,
    )

    if (p * h) % 8 == 0 or p == n:
        # Fast path: planes flattened along the sublane-major axis so the
        # X-resize of all P planes is one big MXU matmul. The wrapper reshape
        # is contiguous (pure metadata).
        flat = img.reshape(n * h, w)
        in_spec = pl.BlockSpec((p * h, w), lambda i: (i, 0))
        kernel = _resize_kernel_merged
    else:
        flat = img.reshape(n, h, w)
        in_spec = pl.BlockSpec((p, h, w), lambda i: (i, 0, 0))
        kernel = _resize_kernel_per_plane

    out_flat = pl.pallas_call(
        kernel,
        out_shape=out_shape,
        grid=grid,
        in_specs=[in_spec, wy_spec, wxT_spec],
        out_specs=out_spec,
        compiler_params=compiler_params,
    )(flat, wy, wxT)
    return out_flat.reshape(b, c, out_h, out_w)


# ----------------------------------------------------------------------------
# Intrinsics: tiny (B,3,3) elementwise op -> plain jnp (XLA fuses it for free).
# ----------------------------------------------------------------------------
def _intrinsic_scale(k, sx, sy):
    scale = jnp.array([[sx, 1.0, sx],
                       [1.0, sy, sy],
                       [1.0, 1.0, 1.0]], dtype=k.dtype)
    return k * scale[None]


def _flip_intrinsics(k, w_out):
    return k.at[:, 0, 2].set(w_out - k[:, 0, 2])


# ----------------------------------------------------------------------------
# Augmentation_Resize_Only forward (test branch)
# ----------------------------------------------------------------------------
def augmentation_resize_only_forward(example_dict, imgsize=(128, 416)):
    # TODO(synk): photometric augmentation branch (PhotometricAugmentation) is
    # disabled by default in the module (photometric=False) and not implemented.
    out = dict(example_dict)
    b, _, hh, ww = example_dict["input_l1"].shape
    sy = imgsize[0] / hh
    sx = imgsize[1] / ww

    has_right = "input_r1" in example_dict and "input_r2" in example_dict

    # Fuse every image resize of this forward pass into a single pallas_call
    # (shared Wy / Wx weight matrices, one pipeline warmup/drain).
    imgs = [example_dict["input_l1"], example_dict["input_l2"]]
    if has_right:
        imgs += [example_dict["input_r1"], example_dict["input_r2"]]
    stacked = jnp.concatenate(imgs, axis=0)
    resized = interpolate2d_pallas(stacked, imgsize)
    im_l1, im_l2 = resized[:b], resized[b:2 * b]
    if has_right:
        im_r1, im_r2 = resized[2 * b:3 * b], resized[3 * b:4 * b]

    k_l1 = _intrinsic_scale(example_dict["input_k_l1"], sx, sy)
    k_l2 = _intrinsic_scale(example_dict["input_k_l2"], sx, sy)

    out["input_l1_aug"] = im_l1
    out["input_l2_aug"] = im_l2
    out["input_k_l1_aug"] = k_l1
    out["input_k_l2_aug"] = k_l2

    if has_right:
        k_r1 = _intrinsic_scale(example_dict["input_k_r1"], sx, sy)
        k_r2 = _intrinsic_scale(example_dict["input_k_r2"], sx, sy)
        out["input_r1_aug"] = im_r1
        out["input_r2_aug"] = im_r2
        out["input_k_r1_aug"] = k_r1
        out["input_k_r2_aug"] = k_r2

    # Flipped intrinsics: cx' = W_out - cx (exactly the reference formula).
    w_out = im_l1.shape[3]
    out["input_k_l1_flip_aug"] = _flip_intrinsics(k_l1, w_out)
    out["input_k_l2_flip_aug"] = _flip_intrinsics(k_l2, w_out)
    if has_right:
        out["input_k_r1_flip_aug"] = _flip_intrinsics(k_r1, w_out)
        out["input_k_r2_flip_aug"] = _flip_intrinsics(k_r2, w_out)

    aug_size = jnp.zeros_like(example_dict["input_size"])
    aug_size = aug_size.at[:, 0].set(imgsize[0])
    aug_size = aug_size.at[:, 1].set(imgsize[1])
    out["aug_size"] = aug_size
    return out


# ----------------------------------------------------------------------------
# Demo
# ----------------------------------------------------------------------------
if __name__ == "__main__":
    key = jax.random.PRNGKey(0)
    k1, k2 = jax.random.split(key)

    B, C, H, W = 2, 3, 16, 24
    IMGSIZE = (8, 16)

    im_l1_in = jax.random.uniform(k1, (B, C, H, W), dtype=jnp.float32)
    im_l2_in = jax.random.uniform(k2, (B, C, H, W), dtype=jnp.float32)

    # Deterministic synthetic camera intrinsics [[fx,0,cx],[0,fy,cy],[0,0,1]].
    base_k = jnp.array([[20.0, 0.0, W / 2.0],
                        [0.0, 22.0, H / 2.0],
                        [0.0, 0.0, 1.0]], dtype=jnp.float32)
    k_l1_in = jnp.broadcast_to(base_k[None], (B, 3, 3))
    k_l2_in = jnp.broadcast_to((base_k * 1.05)[None], (B, 3, 3)).astype(jnp.float32)

    input_size = jnp.tile(jnp.array([[H, W]], dtype=jnp.float32), (B, 1))

    example_dict = {
        "input_l1": im_l1_in,
        "input_l2": im_l2_in,
        "input_k_l1": k_l1_in,
        "input_k_l2": k_l2_in,
        "input_size": input_size,
    }

    result = augmentation_resize_only_forward(example_dict, imgsize=IMGSIZE)
    jax.block_until_ready(result["input_l1_aug"])
    jax.block_until_ready(result["input_l2_aug"])
    jax.block_until_ready(result["input_k_l1_aug"])
    jax.block_until_ready(result["aug_size"])

    # Shape checks.
    assert result["input_l1_aug"].shape == (B, C, IMGSIZE[0], IMGSIZE[1])
    assert result["input_l2_aug"].shape == (B, C, IMGSIZE[0], IMGSIZE[1])
    assert result["input_k_l1_aug"].shape == (B, 3, 3)
    assert result["aug_size"].shape == input_size.shape

    # Numerical check of the resize against a plain einsum reference with the
    # same separable bilinear (align_corners=True) weights.
    wy_np = _bilinear_weight_matrix_np(IMGSIZE[0], H)
    wx_np = _bilinear_weight_matrix_np(IMGSIZE[1], W)
    ref_l1 = np.einsum("oh,nchw,xw->ncox", wy_np, np.asarray(im_l1_in), wx_np)
    ref_l2 = np.einsum("oh,nchw,xw->ncox", wy_np, np.asarray(im_l2_in), wx_np)
    assert np.allclose(np.asarray(result["input_l1_aug"]), ref_l1, atol=1e-5)
    assert np.allclose(np.asarray(result["input_l2_aug"]), ref_l2, atol=1e-5)

    # Intrinsic scaling check.
    sy, sx = IMGSIZE[0] / H, IMGSIZE[1] / W
    ref_k = np.asarray(k_l1_in).copy()
    ref_k[:, 0, 0] *= sx
    ref_k[:, 0, 2] *= sx
    ref_k[:, 1, 1] *= sy
    ref_k[:, 1, 2] *= sy
    assert np.allclose(np.asarray(result["input_k_l1_aug"]), ref_k, atol=1e-6)

    print("KERNEL_OK")
</pallas_src>

<mosaic_0001>
module attributes {stable_mosaic.version = 11 : i64} {
  func.func @_resize_kernel_merged(%arg0: i32, %arg1: memref<96x24xf32, #tpu.memory_space<vmem>>, %arg2: memref<8x16xf32, #tpu.memory_space<vmem>>, %arg3: memref<24x16xf32, #tpu.memory_space<vmem>>, %arg4: memref<6x8x16xf32, #tpu.memory_space<vmem>>) attributes {dimension_semantics = [#tpu.dimension_semantics<parallel>], iteration_bounds = array<i64: 2>, scalar_prefetch = 0 : i64, scratch_operands = 0 : i64, tpu.core_type = #tpu.core_type<tc>, window_params = [{transform_indices = @transform_0, window_bounds = array<i64: 96, 24>}, {pipeline_mode = #tpu.pipeline_mode<synchronous>, transform_indices = @transform_1, window_bounds = array<i64: 8, 16>}, {pipeline_mode = #tpu.pipeline_mode<synchronous>, transform_indices = @transform_2, window_bounds = array<i64: 24, 16>}, {transform_indices = @transform_3, window_bounds = array<i64: 6, 8, 16>}]} {
    %c0 = arith.constant 0 : index
    %c0_0 = arith.constant 0 : index
    %0 = vector.load %arg2[%c0, %c0_0] : memref<8x16xf32, #tpu.memory_space<vmem>>, vector<8x16xf32>
    %c0_1 = arith.constant 0 : index
    %c0_2 = arith.constant 0 : index
    %1 = vector.load %arg1[%c0_1, %c0_2] : memref<96x24xf32, #tpu.memory_space<vmem>>, vector<96x24xf32>
    %c0_3 = arith.constant 0 : index
    %c0_4 = arith.constant 0 : index
    %2 = vector.load %arg3[%c0_3, %c0_4] : memref<24x16xf32, #tpu.memory_space<vmem>>, vector<24x16xf32>
    %cst = arith.constant dense<0.000000e+00> : vector<96x16xf32>
    %3 = tpu.matmul %1, %2, %cst {dimension_numbers = #tpu.dot_dimension_numbers<[1], [0], [0], [1], [0, 0, 1, 1], [], []>} : vector<96x24xf32>, vector<24x16xf32>, vector<96x16xf32> -> vector<96x16xf32>
    %4 = vector.extract_strided_slice %3 {offsets = [0, 0], sizes = [16, 16], strides = [1, 1]} : vector<96x16xf32> to vector<16x16xf32>
    %cst_5 = arith.constant dense<0.000000e+00> : vector<8x16xf32>
    %5 = tpu.matmul %0, %4, %cst_5 {dimension_numbers = #tpu.dot_dimension_numbers<[1], [0], [0], [1], [0, 0, 1, 1], [], []>} : vector<8x16xf32>, vector<16x16xf32>, vector<8x16xf32> -> vector<8x16xf32>
    %c0_6 = arith.constant 0 : index
    %c0_7 = arith.constant 0 : index
    %c0_8 = arith.constant 0 : index
    %6 = vector.load %arg4[%c0_6, %c0_7, %c0_8] : memref<6x8x16xf32, #tpu.memory_space<vmem>>, vector<1x8x16xf32>
    %7 = vector.shape_cast %6 : vector<1x8x16xf32> to vector<8x16xf32>
    %8 = vector.shape_cast %5 : vector<8x16xf32> to vector<1x8x16xf32>
    tpu.vector_store %arg4[%c0_6, %c0_7, %c0_8], %8 {strides = array<i32>} : memref<6x8x16xf32, #tpu.memory_space<vmem>>, vector<1x8x16xf32>,
    %9 = vector.extract_strided_slice %3 {offsets = [16, 0], sizes = [16, 16], strides = [1, 1]} : vector<96x16xf32> to vector<16x16xf32>
    %cst_9 = arith.constant dense<0.000000e+00> : vector<8x16xf32>
    %10 = tpu.matmul %0, %9, %cst_9 {dimension_numbers = #tpu.dot_dimension_numbers<[1], [0], [0], [1], [0, 0, 1, 1], [], []>} : vector<8x16xf32>, vector<16x16xf32>, vector<8x16xf32> -> vector<8x16xf32>
    %c1 = arith.constant 1 : index
    %c0_10 = arith.constant 0 : index
    %c0_11 = arith.constant 0 : index
    %11 = vector.load %arg4[%c1, %c0_10, %c0_11] : memref<6x8x16xf32, #tpu.memory_space<vmem>>, vector<1x8x16xf32>
    %12 = vector.shape_cast %11 : vector<1x8x16xf32> to vector<8x16xf32>
    %13 = vector.shape_cast %10 : vector<8x16xf32> to vector<1x8x16xf32>
    tpu.vector_store %arg4[%c1, %c0_10, %c0_11], %13 {strides = array<i32>} : memref<6x8x16xf32, #tpu.memory_space<vmem>>, vector<1x8x16xf32>,
    %14 = vector.extract_strided_slice %3 {offsets = [32, 0], sizes = [16, 16], strides = [1, 1]} : vector<96x16xf32> to vector<16x16xf32>
    %cst_12 = arith.constant dense<0.000000e+00> : vector<8x16xf32>
    %15 = tpu.matmul %0, %14, %cst_12 {dimension_numbers = #tpu.dot_dimension_numbers<[1], [0], [0], [1], [0, 0, 1, 1], [], []>} : vector<8x16xf32>, vector<16x16xf32>, vector<8x16xf32> -> vector<8x16xf32>
    %c2 = arith.constant 2 : index
    %c0_13 = arith.constant 0 : index
    %c0_14 = arith.constant 0 : index
    %16 = vector.load %arg4[%c2, %c0_13, %c0_14] : memref<6x8x16xf32, #tpu.memory_space<vmem>>, vector<1x8x16xf32>
    %17 = vector.shape_cast %16 : vector<1x8x16xf32> to vector<8x16xf32>
    %18 = vector.shape_cast %15 : vector<8x16xf32> to vector<1x8x16xf32>
    tpu.vector_store %arg4[%c2, %c0_13, %c0_14], %18 {strides = array<i32>} : memref<6x8x16xf32, #tpu.memory_space<vmem>>, vector<1x8x16xf32>,
    %19 = vector.extract_strided_slice %3 {offsets = [48, 0], sizes = [16, 16], strides = [1, 1]} : vector<96x16xf32> to vector<16x16xf32>
    %cst_15 = arith.constant dense<0.000000e+00> : vector<8x16xf32>
    %20 = tpu.matmul %0, %19, %cst_15 {dimension_numbers = #tpu.dot_dimension_numbers<[1], [0], [0], [1], [0, 0, 1, 1], [], []>} : vector<8x16xf32>, vector<16x16xf32>, vector<8x16xf32> -> vector<8x16xf32>
    %c3 = arith.constant 3 : index
    %c0_16 = arith.constant 0 : index
    %c0_17 = arith.constant 0 : index
    %21 = vector.load %arg4[%c3, %c0_16, %c0_17] : memref<6x8x16xf32, #tpu.memory_space<vmem>>, vector<1x8x16xf32>
    %22 = vector.shape_cast %21 : vector<1x8x16xf32> to vector<8x16xf32>
    %23 = vector.shape_cast %20 : vector<8x16xf32> to vector<1x8x16xf32>
    tpu.vector_store %arg4[%c3, %c0_16, %c0_17], %23 {strides = array<i32>} : memref<6x8x16xf32, #tpu.memory_space<vmem>>, vector<1x8x16xf32>,
    %24 = vector.extract_strided_slice %3 {offsets = [64, 0], sizes = [16, 16], strides = [1, 1]} : vector<96x16xf32> to vector<16x16xf32>
    %cst_18 = arith.constant dense<0.000000e+00> : vector<8x16xf32>
    %25 = tpu.matmul %0, %24, %cst_18 {dimension_numbers = #tpu.dot_dimension_numbers<[1], [0], [0], [1], [0, 0, 1, 1], [], []>} : vector<8x16xf32>, vector<16x16xf32>, vector<8x16xf32> -> vector<8x16xf32>
    %c4 = arith.constant 4 : index
    %c0_19 = arith.constant 0 : index
    %c0_20 = arith.constant 0 : index
    %26 = vector.load %arg4[%c4, %c0_19, %c0_20] : memref<6x8x16xf32, #tpu.memory_space<vmem>>, vector<1x8x16xf32>
    %27 = vector.shape_cast %26 : vector<1x8x16xf32> to vector<8x16xf32>
    %28 = vector.shape_cast %25 : vector<8x16xf32> to vector<1x8x16xf32>
    tpu.vector_store %arg4[%c4, %c0_19, %c0_20], %28 {strides = array<i32>} : memref<6x8x16xf32, #tpu.memory_space<vmem>>, vector<1x8x16xf32>,
    %29 = vector.extract_strided_slice %3 {offsets = [80, 0], sizes = [16, 16], strides = [1, 1]} : vector<96x16xf32> to vector<16x16xf32>
    %cst_21 = arith.constant dense<0.000000e+00> : vector<8x16xf32>
    %30 = tpu.matmul %0, %29, %cst_21 {dimension_numbers = #tpu.dot_dimension_numbers<[1], [0], [0], [1], [0, 0, 1, 1], [], []>} : vector<8x16xf32>, vector<16x16xf32>, vector<8x16xf32> -> vector<8x16xf32>
    %c5 = arith.constant 5 : index
    %c0_22 = arith.constant 0 : index
    %c0_23 = arith.constant 0 : index
    %31 = vector.load %arg4[%c5, %c0_22, %c0_23] : memref<6x8x16xf32, #tpu.memory_space<vmem>>, vector<1x8x16xf32>
    %32 = vector.shape_cast %31 : vector<1x8x16xf32> to vector<8x16xf32>
    %33 = vector.shape_cast %30 : vector<8x16xf32> to vector<1x8x16xf32>
    tpu.vector_store %arg4[%c5, %c0_22, %c0_23], %33 {strides = array<i32>} : memref<6x8x16xf32, #tpu.memory_space<vmem>>, vector<1x8x16xf32>,
    return
  }
  func.func @transform_0(%arg0: i32) -> (i32, i32) {
    %c0_i32 = arith.constant 0 : i32
    %c0_i32_0 = arith.constant 0 : i32
    return %arg0, %c0_i32 : i32, i32
  }
  func.func @transform_1(%arg0: i32) -> (i32, i32) {
    %c0_i32 = arith.constant 0 : i32
    %c0_i32_0 = arith.constant 0 : i32
    %c0_i32_1 = arith.constant 0 : i32
    return %c0_i32, %c0_i32_0 : i32, i32
  }
  func.func @transform_2(%arg0: i32) -> (i32, i32) {
    %c0_i32 = arith.constant 0 : i32
    %c0_i32_0 = arith.constant 0 : i32
    %c0_i32_1 = arith.constant 0 : i32
    return %c0_i32, %c0_i32_0 : i32, i32
  }
  func.func @transform_3(%arg0: i32) -> (i32, i32, i32) {
    %c0_i32 = arith.constant 0 : i32
    %c0_i32_0 = arith.constant 0 : i32
    %c0_i32_1 = arith.constant 0 : i32
    return %arg0, %c0_i32, %c0_i32_0 : i32, i32, i32
  }
}

</mosaic_0001>

<llo_original>
// kernel: tpu_custom_call.1
$region0: #{tpu_custom_call.1}
  #allocation0 [shape = 'u32[]', space=smem, size = 0x4, offset = 0x4, fixed_abs, tag = 'smem constant byte address 0x4 - core index']
  #allocation1 [shape = 'u32[144,128]{1,0:T(1,128)}', space=vmem, size = 0x12000, scoped, tag = 'internal scratch']
  %s0 = inlined_call_operand.vmem [shape: f32[192,24], index: 0, kind: input, shape index: {}]
  %s1 = inlined_call_operand.vmem [shape: f32[8,16], index: 1, kind: input, shape index: {}]
  %s2 = inlined_call_operand.vmem [shape: f32[24,16], index: 2, kind: input, shape index: {}]
  %s3 = inlined_call_operand.hbm [shape: f32[12,8,16], index: 3, kind: output, shape index: {}]
  %s4 = sld [smem:[#allocation0]]
  $region45: #{tpu_custom_call.1} parent=0
    _
  %s6 = ssub.s32 1, %s4
  %s7 = scalar_select 0, %s6, %s4
  $region1: #{tpu_custom_call.1} parent=0
    #allocation2 [shape = 'u8[49152]{0}', space=vmem, size = 0xc000, scoped, tag = 'output window, operand 0']
    #allocation3 [shape = 's32[2]{0}', space=sflag, size = 0x8, scoped, tag = 'scoped memory for tpu_custom_call.1']
    %8 = vsyncpa [#allocation3], 0
    %s9 = scalar_lea.sflag [#allocation3], 1
    %10 = vsyncpa %s9, 0
    loop: start=0, step=1, limit=4
    $region2: #{tpu_custom_call.1} parent=1 // loop_pre_header
      _
    $region3: #{tpu_custom_call.1} parent=1 // loop_header
      %s12 = sphi 0, %s16
      %p13 = scmp.ge.s32.totalorder %s12, 4
      %s22 = sphi 0, %s24
      %s25 = sphi 0, %s22
      %s26 = sphi 0, %s25
      %s42 = sphi 0, %s26
      %s46 = sphi 0, %s46
      %s48 = sphi 0, %s46
      %s49 = sphi 0, %s48
      %s63 = sphi 0, %s49
      %s67 = sphi 0, %s67
      %s69 = sphi 0, %s67
      %s70 = sphi 0, %s69
      %s84 = sphi 0, %s70
      %s90 = sphi 0, %s92
      %s93 = sphi 0, %s90
      %s94 = sphi 0, %s93
      %s110 = sphi 0, %s94
    $region4: #{tpu_custom_call.1} parent=1 // loop_header_branch
      %15 = sbr.rel (%p13) target = $region8
    $region5: #{tpu_custom_call.1} parent=1 // loop_body
      %s17 = ssub.s32 %s12, 1
      %s18 = ssub.s32 %s12, 2
      %s19 = sadd.s32 %s12, 1
      %s20 = ssub.s32 %s12, %s19
      %p21 = scmp.eq.s32.totalorder %s20, 0
      %s23 = sadd.s32 %s22, 1
      %s24 = scalar_select %p21, %s22, %s23
      %p27 = pneg %p21
      %p28 = scmp.eq.s32.totalorder %s12, 1
      %p29 = por %p27, %p28
      %p30 = scmp.ne.s32.totalorder %s22, %s25
      %p31 = scmp.eq.s32.totalorder %s12, 0
      %p32 = por %p30, %p31
      %p33 = scmp.ne.s32.totalorder %s22, %s25
      %p34 = scmp.eq.s32.totalorder %s17, 1
      %p35 = por %p33, %p34
      %p36 = scmp.ne.s32.totalorder %s25, %s26
      %p37 = scmp.eq.s32.totalorder %s17, 0
      %p38 = por %p36, %p37
      %p39 = scmp.ne.s32.totalorder %s25, %s26
      %p40 = scmp.eq.s32.totalorder %s18, 1
      %p41 = por %p39, %p40
      %p43 = scmp.ne.s32.totalorder %s26, %s42
      %p44 = scmp.eq.s32.totalorder %s18, 0
      %p45 = por %p43, %p44
      %s47 = sadd.s32 %s46, 1
      %p50 = scmp.eq.s32.totalorder %s12, 1
      %p51 = scmp.ne.s32.totalorder %s46, %s48
      %p52 = scmp.eq.s32.totalorder %s12, 0
      %p53 = por %p51, %p52
      %p54 = scmp.ne.s32.totalorder %s46, %s48
      %p55 = scmp.eq.s32.totalorder %s17, 1
      %p56 = por %p54, %p55
      %p57 = scmp.ne.s32.totalorder %s48, %s49
      %p58 = scmp.eq.s32.totalorder %s17, 0
      %p59 = por %p57, %p58
      %p60 = scmp.ne.s32.totalorder %s48, %s49
      %p61 = scmp.eq.s32.totalorder %s18, 1
      %p62 = por %p60, %p61
      %p64 = scmp.ne.s32.totalorder %s49, %s63
      %p65 = scmp.eq.s32.totalorder %s18, 0
      %p66 = por %p64, %p65
      %s68 = sadd.s32 %s67, 1
      %p71 = scmp.eq.s32.totalorder %s12, 1
      %p72 = scmp.ne.s32.totalorder %s67, %s69
      %p73 = scmp.eq.s32.totalorder %s12, 0
      %p74 = por %p72, %p73
      %p75 = scmp.ne.s32.totalorder %s67, %s69
      %p76 = scmp.eq.s32.totalorder %s17, 1
      %p77 = por %p75, %p76
      %p78 = scmp.ne.s32.totalorder %s69, %s70
      %p79 = scmp.eq.s32.totalorder %s17, 0
      %p80 = por %p78, %p79
      %p81 = scmp.ne.s32.totalorder %s69, %s70
      %p82 = scmp.eq.s32.totalorder %s18, 1
      %p83 = por %p81, %p82
      %p85 = scmp.ne.s32.totalorder %s70, %s84
      %p86 = scmp.eq.s32.totalorder %s18, 0
      %p87 = por %p85, %p86
      %s88 = ssub.s32 %s12, %s19
      %p89 = scmp.eq.s32.totalorder %s88, 0
      %s91 = sadd.s32 %s90, 1
      %s92 = scalar_select %p89, %s90, %s91
      %p95 = pneg %p89
      %p96 = scmp.eq.s32.totalorder %s12, 1
      %p97 = por %p95, %p96
      %p98 = scmp.ne.s32.totalorder %s90, %s93
      %p99 = scmp.eq.s32.totalorder %s12, 0
      %p100 = por %p98, %p99
      %p101 = scmp.ne.s32.totalorder %s90, %s93
      %p102 = scmp.eq.s32.totalorder %s17, 1
      %p103 = por %p101, %p102
      %p104 = scmp.ne.s32.totalorder %s93, %s94
      %p105 = scmp.eq.s32.totalorder %s17, 0
      %p106 = por %p104, %p105
      %p107 = scmp.ne.s32.totalorder %s93, %s94
      %p108 = scmp.eq.s32.totalorder %s18, 1
      %p109 = por %p107, %p108
      %p111 = scmp.ne.s32.totalorder %s94, %s110
      %p112 = scmp.eq.s32.totalorder %s18, 0
      %p113 = por %p111, %p112
      %p114 = scmp.le.s32.totalorder 1, %s12
      %p115 = scmp.lt.s32.totalorder %s12, 3
      %p116 = pnand %p114, %p115
      %p117 = pneg %p116
      // Predicated region
      $region9: #{tpu_custom_call.1} parent=5 // pred_check
        _
      $region10: #{tpu_custom_call.1} parent=5 // pred_check_branch
        %119 = sbr.rel (%p116) target = $region12
      $region11: #{tpu_custom_call.1} parent=5 // pred_region
        %s120 = ssub.s32 %s12, 1
        // Predicated region
        $region13: #{tpu_custom_call.1} parent=11 // pred_check
          %p121 = pneg %p59
        $region14: #{tpu_custom_call.1} parent=11 // pred_check_branch
          %123 = sbr.rel (%p121) target = $region16
        $region15: #{tpu_custom_call.1} parent=11 // pred_region
          _
        $region16: #{tpu_custom_call.1} parent=11 // pred_fallthru
          _
        // Predicated region
        $region17: #{tpu_custom_call.1} parent=11 // pred_check
          %p124 = pneg %p80
        $region18: #{tpu_custom_call.1} parent=11 // pred_check_branch
          %126 = sbr.rel (%p124) target = $region20
        $region19: #{tpu_custom_call.1} parent=11 // pred_region
          _
        $region20: #{tpu_custom_call.1} parent=11 // pred_fallthru
          _
      $region12: #{tpu_custom_call.1} parent=5 // pred_fallthru
        _
      %p127 = scmp.lt.s32.totalorder %s12, 2
      // Predicated region
      $region21: #{tpu_custom_call.1} parent=5 // pred_check
        %p128 = pneg %p127
      $region22: #{tpu_custom_call.1} parent=5 // pred_check_branch
        %130 = sbr.rel (%p128) target = $region24
      $region23: #{tpu_custom_call.1} parent=5 // pred_region
        // Predicated region
        $region25: #{tpu_custom_call.1} parent=23 // pred_check
          %p131 = pneg %p32
        $region26: #{tpu_custom_call.1} parent=23 // pred_check_branch
          %133 = sbr.rel (%p131) target = $region28
        $region27: #{tpu_custom_call.1} parent=23 // pred_region
          %s134 = smul.u32 12, %s12
          %p135 = scmp.lt.s32.totalorder %s134, 23
          %s136 = scalar_select %p135, %s134, 23
          %s137 = smul.addr %s136, 8
          %s138 = scalar_lea.vmem %s0, %s137
          %s139 = smul.u32 12, %s12
        $region28: #{tpu_custom_call.1} parent=23 // pred_fallthru
          _
      $region24: #{tpu_custom_call.1} parent=5 // pred_fallthru
        _
      %p140 = scmp.le.s32.totalorder 1, %s12
      %p141 = scmp.lt.s32.totalorder %s12, 3
      %p142 = pnand %p140, %p141
      %p143 = pneg %p142
      // Predicated region
      $region29: #{tpu_custom_call.1} parent=5 // pred_check
        _
      $region30: #{tpu_custom_call.1} parent=5 // pred_check_branch
        %145 = sbr.rel (%p142) target = $region32
      $region31: #{tpu_custom_call.1} parent=5 // pred_region
        %s146 = ssub.s32 %s12, 1
        %s147 = smul.u32 12, %s17
        %p148 = scmp.lt.s32.totalorder %s147, 23
        %s149 = scalar_select %p148, %s147, 23
        %s150 = smul.addr %s149, 8
        %s151 = scalar_lea.vmem %s0, %s150
        %p152 = pneg %p38
        %p153 = pneg %p35
        %p154 = pneg %p59
        %p155 = pneg %p56
        %p156 = pneg %p80
        %p157 = pneg %p77
        %p158 = pneg %p106
        %p159 = pneg %p103
        %s160 = sand.u32 %s93, 1
        %s161 = scalar_lea.sflag [#allocation3], %s160
        %s162 = sand.u32 %s93, 1
        %s163 = smul.addr %s162, 48
        %s164 = scalar_lea.vmem [#allocation2], %s163
        %s165 = smul.u32 12, %s17
        %p166 = scmp.lt.s32.totalorder %s165, 23
        %s167 = scalar_select %p166, %s165, 23
        %s168 = smul.addr %s167, 8
        %s169 = scalar_lea.vmem %s0, %s168
        %s170 = smul.u32 12, %s17
        %s171 = smul.u32 6, %s17
        %v172 = vld [vmem:[%s1] sm:$0xff]
        %v173 = vld [vmem:[%s169] sm:$0xff]
        %v174 = vld [vmem:[%s169 + $0x8] sm:$0xff]
        %v175 = vld [vmem:[%s169 + $0x10] sm:$0xff]
        %v176 = vld [vmem:[%s169 + $0x18] sm:$0xff]
        %v177 = vld [vmem:[%s169 + $0x20] sm:$0xff]
        %v178 = vld [vmem:[%s169 + $0x28] sm:$0xff]
        %v179 = vld [vmem:[%s169 + $0x30] sm:$0xff]
        %v180 = vld [vmem:[%s169 + $0x38] sm:$0xff]
        %v181 = vld [vmem:[%s169 + $0x40] sm:$0xff]
        %v182 = vld [vmem:[%s169 + $0x48] sm:$0xff]
        %v183 = vld [vmem:[%s169 + $0x50] sm:$0xff]
        %v184 = vld [vmem:[%s169 + $0x58] sm:$0xff]
        %v185 = vld [vmem:[%s2] sm:$0xff]
        %v186 = vld [vmem:[%s2 + $0x8] sm:$0xff]
        %v187 = vld [vmem:[%s2 + $0x10] sm:$0xff]
        %vm188 = vcmask 195584
        %v190 = vsel %vm188, %v173, 0
        %v193 = vsel %vm188, %v174, 0
        %v196 = vsel %vm188, %v175, 0
        %v199 = vsel %vm188, %v176, 0
        %v202 = vsel %vm188, %v177, 0
        %v205 = vsel %vm188, %v178, 0
        %v208 = vsel %vm188, %v179, 0
        %v211 = vsel %vm188, %v180, 0
        %v214 = vsel %vm188, %v181, 0
        %v217 = vsel %vm188, %v182, 0
        %v220 = vsel %vm188, %v183, 0
        %v223 = vsel %vm188, %v184, 0
        %225 = vmatprep.subr.mxu0 0.0
        %226 = vmatpush1.msra.mxu0 0.0
        %227 = vmatprep.subr.mxu0 0.0
        %228 = vmatpush1.msra.mxu0 0.0
        %229 = vmatprep.subr.mxu0 0.0
        %230 = vmatpush1.msra.mxu0 0.0
        %231 = vmatprep.subr.mxu0 0.0
        %232 = vmatpush1.msra.mxu0 0.0
        %233 = vmatprep.subr.mxu0 0.0
        %234 = vmatpush1.msra.mxu0 0.0
        %235 = vmatprep.subr.mxu0 0.0
        %236 = vmatpush1.msra.mxu0 0.0
        %237 = vmatprep.subr.mxu0 0.0
        %238 = vmatpush1.msra.mxu0 0.0
        %239 = vmatprep.subr.mxu0 0.0
        %240 = vmatpush1.msra.mxu0 0.0
        %241 = vmatprep.subr.mxu0 0.0
        %242 = vmatpush1.msra.mxu0 0.0
        %243 = vmatprep.subr.mxu0 0.0
        %244 = vmatpush1.msra.mxu0 0.0
        %245 = vmatprep.subr.mxu0 0.0
        %246 = vmatpush1.msra.mxu0 0.0
        %247 = vmatprep.subr.mxu0 0.0
        %248 = vmatpush1.msra.mxu0 0.0
        %249 = vmatprep.subr.mxu0 0.0
        %250 = vmatpush1.msra.mxu0 0.0
        %251 = vmatprep.subr.mxu0 0.0
        %252 = vmatpush1.msra.mxu0 %v187
        %253 = vmatprep.subr.mxu0 0.0
        %254 = vmatpush1.msra.mxu0 %v186
        %255 = vmatprep.subr.mxu0 0.0
        %256 = vmatpush1.msra.mxu0 %v185
        %257 = vmatprep.subr.mxu0 0.0
        %258 = vmatpush2.msra.mxu0 0.0
        %259 = vmatprep.subr.mxu0 0.0
        %260 = vmatpush2.msra.mxu0 0.0
        %261 = vmatprep.subr.mxu0 0.0
        %262 = vmatpush2.msra.mxu0 0.0
        %263 = vmatprep.subr.mxu0 0.0
        %264 = vmatpush2.msra.mxu0 0.0
        %265 = vmatprep.subr.mxu0 0.0
        %266 = vmatpush2.msra.mxu0 0.0
        %267 = vmatprep.subr.mxu0 0.0
        %268 = vmatpush2.msra.mxu0 0.0
        %269 = vmatprep.subr.mxu0 0.0
        %270 = vmatpush2.msra.mxu0 0.0
        %271 = vmatprep.subr.mxu0 0.0
        %272 = vmatpush2.msra.mxu0 0.0
        %273 = vmatprep.subr.mxu0 0.0
        %274 = vmatpush2.msra.mxu0 0.0
        %275 = vmatprep.subr.mxu0 0.0
        %276 = vmatpush2.msra.mxu0 0.0
        %277 = vmatprep.subr.mxu0 0.0
        %278 = vmatpush2.msra.mxu0 0.0
        %279 = vmatprep.subr.mxu0 0.0
        %280 = vmatpush2.msra.mxu0 0.0
        %281 = vmatprep.subr.mxu0 0.0
        %282 = vmatpush2.msra.mxu0 0.0
        %283 = vmatprep.subr.mxu0 0.0
        %284 = vmatpush2.msra.mxu0 0.0
        %285 = vmatprep.subr.mxu0 0.0
        %286 = vmatpush2.msra.mxu0 0.0
        %287 = vmatprep.subr.mxu0 0.0
        %288 = vmatpush2.msra.mxu0 0.0
        %289 = vmatprep.mubr.f32.mxu0 0.0
        %290 = vmatmul.mubr.f32.gmra.mxu0 %v190
        %v291 = vpop.f32.mrf.mxu0
        %v292 = vadd.f32 0.0, %v291
        %v293 = vpop.f32.mrf.mxu0
        %294 = vmatprep.mubr.f32.mxu0 0.0
        %295 = vmatmul.mubr.f32.gmra.mxu0 %v193
        %v296 = vpop.f32.mrf.mxu0
        %v297 = vadd.f32 0.0, %v296
        %v298 = vpop.f32.mrf.mxu0
        %299 = vmatprep.mubr.f32.mxu0 0.0
        %300 = vmatmul.mubr.f32.gmra.mxu0 %v196
        %v301 = vpop.f32.mrf.mxu0
        %v302 = vadd.f32 0.0, %v301
        %v303 = vpop.f32.mrf.mxu0
        %304 = vmatprep.mubr.f32.mxu0 0.0
        %305 = vmatmul.mubr.f32.gmra.mxu0 %v199
        %v306 = vpop.f32.mrf.mxu0
        %v307 = vadd.f32 0.0, %v306
        %v308 = vpop.f32.mrf.mxu0
        %309 = vmatprep.mubr.f32.mxu0 0.0
        %310 = vmatmul.mubr.f32.gmra.mxu0 %v202
        %v311 = vpop.f32.mrf.mxu0
        %v312 = vadd.f32 0.0, %v311
        %v313 = vpop.f32.mrf.mxu0
        %314 = vmatprep.mubr.f32.mxu0 0.0
        %315 = vmatmul.mubr.f32.gmra.mxu0 %v205
        %v316 = vpop.f32.mrf.mxu0
        %v317 = vadd.f32 0.0, %v316
        %v318 = vpop.f32.mrf.mxu0
        %319 = vmatprep.mubr.f32.mxu0 0.0
        %320 = vmatmul.mubr.f32.gmra.mxu0 %v208
        %v321 = vpop.f32.mrf.mxu0
        %v322 = vadd.f32 0.0, %v321
        %v323 = vpop.f32.mrf.mxu0
        %324 = vmatprep.mubr.f32.mxu0 0.0
        %325 = vmatmul.mubr.f32.gmra.mxu0 %v211
        %v326 = vpop.f32.mrf.mxu0
        %v327 = vadd.f32 0.0, %v326
        %v328 = vpop.f32.mrf.mxu0
        %329 = vmatprep.mubr.f32.mxu0 0.0
        %330 = vmatmul.mubr.f32.gmra.mxu0 %v214
        %v331 = vpop.f32.mrf.mxu0
        %v332 = vadd.f32 0.0, %v331
        %v333 = vpop.f32.mrf.mxu0
        %334 = vmatprep.mubr.f32.mxu0 0.0
        %335 = vmatmul.mubr.f32.gmra.mxu0 %v217
        %v336 = vpop.f32.mrf.mxu0
        %v337 = vadd.f32 0.0, %v336
        %v338 = vpop.f32.mrf.mxu0
        %339 = vmatprep.mubr.f32.mxu0 0.0
        %340 = vmatmul.mubr.f32.gmra.mxu0 %v220
        %v341 = vpop.f32.mrf.mxu0
        %v342 = vadd.f32 0.0, %v341
        %v343 = vpop.f32.mrf.mxu0
        %344 = vmatprep.mubr.f32.mxu0 0.0
        %345 = vmatmul.mubr.f32.gmra.mxu0 %v223
        %v346 = vpop.f32.mrf.mxu0
        %v347 = vadd.f32 0.0, %v346
        %v348 = vpop.f32.mrf.mxu0
        %349 = vdwg.mxu0
        %vm350 = vcmask 130048
        %v352 = vsel %vm350, %v172, 0
        %354 = vmatprep.subr.mxu0 0.0
        %355 = vmatpush1.msra.mxu0 0.0
        %356 = vmatprep.subr.mxu0 0.0
        %357 = vmatpush1.msra.mxu0 0.0
        %358 = vmatprep.subr.mxu0 0.0
        %359 = vmatpush1.msra.mxu0 0.0
        %360 = vmatprep.subr.mxu0 0.0
        %361 = vmatpush1.msra.mxu0 0.0
        %362 = vmatprep.subr.mxu0 0.0
        %363 = vmatpush1.msra.mxu0 0.0
        %364 = vmatprep.subr.mxu0 0.0
        %365 = vmatpush1.msra.mxu0 0.0
        %366 = vmatprep.subr.mxu0 0.0
        %367 = vmatpush1.msra.mxu0 0.0
        %368 = vmatprep.subr.mxu0 0.0
        %369 = vmatpush1.msra.mxu0 0.0
        %370 = vmatprep.subr.mxu0 0.0
        %371 = vmatpush1.msra.mxu0 0.0
        %372 = vmatprep.subr.mxu0 0.0
        %373 = vmatpush1.msra.mxu0 0.0
        %374 = vmatprep.subr.mxu0 0.0
        %375 = vmatpush1.msra.mxu0 0.0
        %376 = vmatprep.subr.mxu0 0.0
        %377 = vmatpush1.msra.mxu0 0.0
        %378 = vmatprep.subr.mxu0 0.0
        %379 = vmatpush1.msra.mxu0 0.0
        %380 = vmatprep.subr.mxu0 0.0
        %381 = vmatpush1.msra.mxu0 0.0
        %382 = vmatprep.subr.mxu0 0.0
        %383 = vmatpush1.msra.mxu0 %v297
        %384 = vmatprep.subr.mxu0 0.0
        %385 = vmatpush1.msra.mxu0 %v292
        %386 = vmatprep.subr.mxu0 0.0
        %387 = vmatpush2.msra.mxu0 0.0
        %388 = vmatprep.subr.mxu0 0.0
        %389 = vmatpush2.msra.mxu0 0.0
        %390 = vmatprep.subr.mxu0 0.0
        %391 = vmatpush2.msra.mxu0 0.0
        %392 = vmatprep.subr.mxu0 0.0
        %393 = vmatpush2.msra.mxu0 0.0
        %394 = vmatprep.subr.mxu0 0.0
        %395 = vmatpush2.msra.mxu0 0.0
        %396 = vmatprep.subr.mxu0 0.0
        %397 = vmatpush2.msra.mxu0 0.0
        %398 = vmatprep.subr.mxu0 0.0
        %399 = vmatpush2.msra.mxu0 0.0
        %400 = vmatprep.subr.mxu0 0.0
        %401 = vmatpush2.msra.mxu0 0.0
        %402 = vmatprep.subr.mxu0 0.0
        %403 = vmatpush2.msra.mxu0 0.0
        %404 = vmatprep.subr.mxu0 0.0
        %405 = vmatpush2.msra.mxu0 0.0
        %406 = vmatprep.subr.mxu0 0.0
        %407 = vmatpush2.msra.mxu0 0.0
        %408 = vmatprep.subr.mxu0 0.0
        %409 = vmatpush2.msra.mxu0 0.0
        %410 = vmatprep.subr.mxu0 0.0
        %411 = vmatpush2.msra.mxu0 0.0
        %412 = vmatprep.subr.mxu0 0.0
        %413 = vmatpush2.msra.mxu0 0.0
        %414 = vmatprep.subr.mxu0 0.0
        %415 = vmatpush2.msra.mxu0 0.0
        %416 = vmatprep.subr.mxu0 0.0
        %417 = vmatpush2.msra.mxu0 0.0
        %418 = vmatprep.mubr.f32.mxu0 0.0
        %419 = vmatmul.mubr.f32.gmra.mxu0 %v352
        %v420 = vpop.f32.mrf.mxu0
        %v421 = vadd.f32 0.0, %v420
        %v422 = vpop.f32.mrf.mxu0
        %423 = vdwg.mxu0
        %424 = vst.msk [vmem:[%s164] sm:$0xff] %vm350, %v421
        %425 = vmatprep.subr.mxu0 0.0
        %426 = vmatpush1.msra.mxu0 0.0
        %427 = vmatprep.subr.mxu0 0.0
        %428 = vmatpush1.msra.mxu0 0.0
        %429 = vmatprep.subr.mxu0 0.0
        %430 = vmatpush1.msra.mxu0 0.0
        %431 = vmatprep.subr.mxu0 0.0
        %432 = vmatpush1.msra.mxu0 0.0
        %433 = vmatprep.subr.mxu0 0.0
        %434 = vmatpush1.msra.mxu0 0.0
        %435 = vmatprep.subr.mxu0 0.0
        %436 = vmatpush1.msra.mxu0 0.0
        %437 = vmatprep.subr.mxu0 0.0
        %438 = vmatpush1.msra.mxu0 0.0
        %439 = vmatprep.subr.mxu0 0.0
        %440 = vmatpush1.msra.mxu0 0.0
        %441 = vmatprep.subr.mxu0 0.0
        %442 = vmatpush1.msra.mxu0 0.0
        %443 = vmatprep.subr.mxu0 0.0
        %444 = vmatpush1.msra.mxu0 0.0
        %445 = vmatprep.subr.mxu0 0.0
        %446 = vmatpush1.msra.mxu0 0.0
        %447 = vmatprep.subr.mxu0 0.0
        %448 = vmatpush1.msra.mxu0 0.0
        %449 = vmatprep.subr.mxu0 0.0
        %450 = vmatpush1.msra.mxu0 0.0
        %451 = vmatprep.subr.mxu0 0.0
        %452 = vmatpush1.msra.mxu0 0.0
        %453 = vmatprep.subr.mxu0 0.0
        %454 = vmatpush1.msra.mxu0 %v307
        %455 = vmatprep.subr.mxu0 0.0
        %456 = vmatpush1.msra.mxu0 %v302
        %457 = vmatprep.subr.mxu0 0.0
        %458 = vmatpush2.msra.mxu0 0.0
        %459 = vmatprep.subr.mxu0 0.0
        %460 = vmatpush2.msra.mxu0 0.0
        %461 = vmatprep.subr.mxu0 0.0
        %462 = vmatpush2.msra.mxu0 0.0
        %463 = vmatprep.subr.mxu0 0.0
        %464 = vmatpush2.msra.mxu0 0.0
        %465 = vmatprep.subr.mxu0 0.0
        %466 = vmatpush2.msra.mxu0 0.0
        %467 = vmatprep.subr.mxu0 0.0
        %468 = vmatpush2.msra.mxu0 0.0
        %469 = vmatprep.subr.mxu0 0.0
        %470 = vmatpush2.msra.mxu0 0.0
        %471 = vmatprep.subr.mxu0 0.0
        %472 = vmatpush2.msra.mxu0 0.0
        %473 = vmatprep.subr.mxu0 0.0
        %474 = vmatpush2.msra.mxu0 0.0
        %475 = vmatprep.subr.mxu0 0.0
        %476 = vmatpush2.msra.mxu0 0.0
        %477 = vmatprep.subr.mxu0 0.0
        %478 = vmatpush2.msra.mxu0 0.0
        %479 = vmatprep.subr.mxu0 0.0
        %480 = vmatpush2.msra.mxu0 0.0
        %481 = vmatprep.subr.mxu0 0.0
        %482 = vmatpush2.msra.mxu0 0.0
        %483 = vmatprep.subr.mxu0 0.0
        %484 = vmatpush2.msra.mxu0 0.0
        %485 = vmatprep.subr.mxu0 0.0
        %486 = vmatpush2.msra.mxu0 0.0
        %487 = vmatprep.subr.mxu0 0.0
        %488 = vmatpush2.msra.mxu0 0.0
        %489 = vmatprep.mubr.f32.mxu0 0.0
        %490 = vmatmul.mubr.f32.gmra.mxu0 %v352
        %v491 = vpop.f32.mrf.mxu0
        %v492 = vadd.f32 0.0, %v491
        %v493 = vpop.f32.mrf.mxu0
        %494 = vdwg.mxu0
        %s495 = scalar_lea.vmem %s164, 8 [#allocation2]
        %496 = vst.msk [vmem:[%s495] sm:$0xff] %vm350, %v492
        %497 = vmatprep.subr.mxu0 0.0
        %498 = vmatpush1.msra.mxu0 0.0
        %499 = vmatprep.subr.mxu0 0.0
        %500 = vmatpush1.msra.mxu0 0.0
        %501 = vmatprep.subr.mxu0 0.0
        %502 = vmatpush1.msra.mxu0 0.0
        %503 = vmatprep.subr.mxu0 0.0
        %504 = vmatpush1.msra.mxu0 0.0
        %505 = vmatprep.subr.mxu0 0.0
        %506 = vmatpush1.msra.mxu0 0.0
        %507 = vmatprep.subr.mxu0 0.0
        %508 = vmatpush1.msra.mxu0 0.0
        %509 = vmatprep.subr.mxu0 0.0
        %510 = vmatpush1.msra.mxu0 0.0
        %511 = vmatprep.subr.mxu0 0.0
        %512 = vmatpush1.msra.mxu0 0.0
        %513 = vmatprep.subr.mxu0 0.0
        %514 = vmatpush1.msra.mxu0 0.0
        %515 = vmatprep.subr.mxu0 0.0
        %516 = vmatpush1.msra.mxu0 0.0
        %517 = vmatprep.subr.mxu0 0.0
        %518 = vmatpush1.msra.mxu0 0.0
        %519 = vmatprep.subr.mxu0 0.0
        %520 = vmatpush1.msra.mxu0 0.0
        %521 = vmatprep.subr.mxu0 0.0
        %522 = vmatpush1.msra.mxu0 0.0
        %523 = vmatprep.subr.mxu0 0.0
        %524 = vmatpush1.msra.mxu0 0.0
        %525 = vmatprep.subr.mxu0 0.0
        %526 = vmatpush1.msra.mxu0 %v317
        %527 = vmatprep.subr.mxu0 0.0
        %528 = vmatpush1.msra.mxu0 %v312
        %529 = vmatprep.subr.mxu0 0.0
        %530 = vmatpush2.msra.mxu0 0.0
        %531 = vmatprep.subr.mxu0 0.0
        %532 = vmatpush2.msra.mxu0 0.0
        %533 = vmatprep.subr.mxu0 0.0
        %534 = vmatpush2.msra.mxu0 0.0
        %535 = vmatprep.subr.mxu0 0.0
        %536 = vmatpush2.msra.mxu0 0.0
        %537 = vmatprep.subr.mxu0 0.0
        %538 = vmatpush2.msra.mxu0 0.0
        %539 = vmatprep.subr.mxu0 0.0
        %540 = vmatpush2.msra.mxu0 0.0
        %541 = vmatprep.subr.mxu0 0.0
        %542 = vmatpush2.msra.mxu0 0.0
        %543 = vmatprep.subr.mxu0 0.0
        %544 = vmatpush2.msra.mxu0 0.0
        %545 = vmatprep.subr.mxu0 0.0
        %546 = vmatpush2.msra.mxu0 0.0
        %547 = vmatprep.subr.mxu0 0.0
        %548 = vmatpush2.msra.mxu0 0.0
        %549 = vmatprep.subr.mxu0 0.0
        %550 = vmatpush2.msra.mxu0 0.0
        %551 = vmatprep.subr.mxu0 0.0
        %552 = vmatpush2.msra.mxu0 0.0
        %553 = vmatprep.subr.mxu0 0.0
        %554 = vmatpush2.msra.mxu0 0.0
        %555 = vmatprep.subr.mxu0 0.0
        %556 = vmatpush2.msra.mxu0 0.0
        %557 = vmatprep.subr.mxu0 0.0
        %558 = vmatpush2.msra.mxu0 0.0
        %559 = vmatprep.subr.mxu0 0.0
        %560 = vmatpush2.msra.mxu0 0.0
        %561 = vmatprep.mubr.f32.mxu0 0.0
        %562 = vmatmul.mubr.f32.gmra.mxu0 %v352
        %v563 = vpop.f32.mrf.mxu0
        %v564 = vadd.f32 0.0, %v563
        %v565 = vpop.f32.mrf.mxu0
        %566 = vdwg.mxu0
        %s567 = scalar_lea.vmem %s164, 16 [#allocation2]
        %568 = vst.msk [vmem:[%s567] sm:$0xff] %vm350, %v564
        %569 = vmatprep.subr.mxu0 0.0
        %570 = vmatpush1.msra.mxu0 0.0
        %571 = vmatprep.subr.mxu0 0.0
        %572 = vmatpush1.msra.mxu0 0.0
        %573 = vmatprep.subr.mxu0 0.0
        %574 = vmatpush1.msra.mxu0 0.0
        %575 = vmatprep.subr.mxu0 0.0
        %576 = vmatpush1.msra.mxu0 0.0
        %577 = vmatprep.subr.mxu0 0.0
        %578 = vmatpush1.msra.mxu0 0.0
        %579 = vmatprep.subr.mxu0 0.0
        %580 = vmatpush1.msra.mxu0 0.0
        %581 = vmatprep.subr.mxu0 0.0
        %582 = vmatpush1.msra.mxu0 0.0
        %583 = vmatprep.subr.mxu0 0.0
        %584 = vmatpush1.msra.mxu0 0.0
        %585 = vmatprep.subr.mxu0 0.0
        %586 = vmatpush1.msra.mxu0 0.0
        %587 = vmatprep.subr.mxu0 0.0
        %588 = vmatpush1.msra.mxu0 0.0
        %589 = vmatprep.subr.mxu0 0.0
        %590 = vmatpush1.msra.mxu0 0.0
        %591 = vmatprep.subr.mxu0 0.0
        %592 = vmatpush1.msra.mxu0 0.0
        %593 = vmatprep.subr.mxu0 0.0
        %594 = vmatpush1.msra.mxu0 0.0
        %595 = vmatprep.subr.mxu0 0.0
        %596 = vmatpush1.msra.mxu0 0.0
        %597 = vmatprep.subr.mxu0 0.0
        %598 = vmatpush1.msra.mxu0 %v327
        %599 = vmatprep.subr.mxu0 0.0
        %600 = vmatpush1.msra.mxu0 %v322
        %601 = vmatprep.subr.mxu0 0.0
        %602 = vmatpush2.msra.mxu0 0.0
        %603 = vmatprep.subr.mxu0 0.0
        %604 = vmatpush2.msra.mxu0 0.0
        %605 = vmatprep.subr.mxu0 0.0
        %606 = vmatpush2.msra.mxu0 0.0
        %607 = vmatprep.subr.mxu0 0.0
        %608 = vmatpush2.msra.mxu0 0.0
        %609 = vmatprep.subr.mxu0 0.0
        %610 = vmatpush2.msra.mxu0 0.0
        %611 = vmatprep.subr.mxu0 0.0
        %612 = vmatpush2.msra.mxu0 0.0
        %613 = vmatprep.subr.mxu0 0.0
        %614 = vmatpush2.msra.mxu0 0.0
        %615 = vmatprep.subr.mxu0 0.0
        %616 = vmatpush2.msra.mxu0 0.0
        %617 = vmatprep.subr.mxu0 0.0
        %618 = vmatpush2.msra.mxu0 0.0
        %619 = vmatprep.subr.mxu0 0.0
        %620 = vmatpush2.msra.mxu0 0.0
        %621 = vmatprep.subr.mxu0 0.0
        %622 = vmatpush2.msra.mxu0 0.0
        %623 = vmatprep.subr.mxu0 0.0
        %624 = vmatpush2.msra.mxu0 0.0
        %625 = vmatprep.subr.mxu0 0.0
        %626 = vmatpush2.msra.mxu0 0.0
        %627 = vmatprep.subr.mxu0 0.0
        %628 = vmatpush2.msra.mxu0 0.0
        %629 = vmatprep.subr.mxu0 0.0
        %630 = vmatpush2.msra.mxu0 0.0
        %631 = vmatprep.subr.mxu0 0.0
        %632 = vmatpush2.msra.mxu0 0.0
        %633 = vmatprep.mubr.f32.mxu0 0.0
        %634 = vmatmul.mubr.f32.gmra.mxu0 %v352
        %v635 = vpop.f32.mrf.mxu0
        %v636 = vadd.f32 0.0, %v635
        %v637 = vpop.f32.mrf.mxu0
        %638 = vdwg.mxu0
        %s639 = scalar_lea.vmem %s164, 24 [#allocation2]
        %640 = vst.msk [vmem:[%s639] sm:$0xff] %vm350, %v636
        %641 = vmatprep.subr.mxu0 0.0
        %642 = vmatpush1.msra.mxu0 0.0
        %643 = vmatprep.subr.mxu0 0.0
        %644 = vmatpush1.msra.mxu0 0.0
        %645 = vmatprep.subr.mxu0 0.0
        %646 = vmatpush1.msra.mxu0 0.0
        %647 = vmatprep.subr.mxu0 0.0
        %648 = vmatpush1.msra.mxu0 0.0
        %649 = vmatprep.subr.mxu0 0.0
        %650 = vmatpush1.msra.mxu0 0.0
        %651 = vmatprep.subr.mxu0 0.0
        %652 = vmatpush1.msra.mxu0 0.0
        %653 = vmatprep.subr.mxu0 0.0
        %654 = vmatpush1.msra.mxu0 0.0
        %655 = vmatprep.subr.mxu0 0.0
        %656 = vmatpush1.msra.mxu0 0.0
        %657 = vmatprep.subr.mxu0 0.0
        %658 = vmatpush1.msra.mxu0 0.0
        %659 = vmatprep.subr.mxu0 0.0
        %660 = vmatpush1.msra.mxu0 0.0
        %661 = vmatprep.subr.mxu0 0.0
        %662 = vmatpush1.msra.mxu0 0.0
        %663 = vmatprep.subr.mxu0 0.0
        %664 = vmatpush1.msra.mxu0 0.0
        %665 = vmatprep.subr.mxu0 0.0
        %666 = vmatpush1.msra.mxu0 0.0
        %667 = vmatprep.subr.mxu0 0.0
        %668 = vmatpush1.msra.mxu0 0.0
        %669 = vmatprep.subr.mxu0 0.0
        %670 = vmatpush1.msra.mxu0 %v337
        %671 = vmatprep.subr.mxu0 0.0
        %672 = vmatpush1.msra.mxu0 %v332
        %673 = vmatprep.subr.mxu0 0.0
        %674 = vmatpush2.msra.mxu0 0.0
        %675 = vmatprep.subr.mxu0 0.0
        %676 = vmatpush2.msra.mxu0 0.0
        %677 = vmatprep.subr.mxu0 0.0
        %678 = vmatpush2.msra.mxu0 0.0
        %679 = vmatprep.subr.mxu0 0.0
        %680 = vmatpush2.msra.mxu0 0.0
        %681 = vmatprep.subr.mxu0 0.0
        %682 = vmatpush2.msra.mxu0 0.0
        %683 = vmatprep.subr.mxu0 0.0
        %684 = vmatpush2.msra.mxu0 0.0
        %685 = vmatprep.subr.mxu0 0.0
        %686 = vmatpush2.msra.mxu0 0.0
        %687 = vmatprep.subr.mxu0 0.0
        %688 = vmatpush2.msra.mxu0 0.0
        %689 = vmatprep.subr.mxu0 0.0
        %690 = vmatpush2.msra.mxu0 0.0
        %691 = vmatprep.subr.mxu0 0.0
        %692 = vmatpush2.msra.mxu0 0.0
        %693 = vmatprep.subr.mxu0 0.0
        %694 = vmatpush2.msra.mxu0 0.0
        %695 = vmatprep.subr.mxu0 0.0
        %696 = vmatpush2.msra.mxu0 0.0
        %697 = vmatprep.subr.mxu0 0.0
        %698 = vmatpush2.msra.mxu0 0.0
        %699 = vmatprep.subr.mxu0 0.0
        %700 = vmatpush2.msra.mxu0 0.0
        %701 = vmatprep.subr.mxu0 0.0
        %702 = vmatpush2.msra.mxu0 0.0
        %703 = vmatprep.subr.mxu0 0.0
        %704 = vmatpush2.msra.mxu0 0.0
        %705 = vmatprep.mubr.f32.mxu0 0.0
        %706 = vmatmul.mubr.f32.gmra.mxu0 %v352
        %v707 = vpop.f32.mrf.mxu0
        %v708 = vadd.f32 0.0, %v707
        %v709 = vpop.f32.mrf.mxu0
        %710 = vdwg.mxu0
        %s711 = scalar_lea.vmem %s164, 32 [#allocation2]
        %712 = vst.msk [vmem:[%s711] sm:$0xff] %vm350, %v708
        %713 = vmatprep.subr.mxu0 0.0
        %714 = vmatpush1.msra.mxu0 0.0
        %715 = vmatprep.subr.mxu0 0.0
        %716 = vmatpush1.msra.mxu0 0.0
        %717 = vmatprep.subr.mxu0 0.0
        %718 = vmatpush1.msra.mxu0 0.0
        %719 = vmatprep.subr.mxu0 0.0
        %720 = vmatpush1.msra.mxu0 0.0
        %721 = vmatprep.subr.mxu0 0.0
        %722 = vmatpush1.msra.mxu0 0.0
        %723 = vmatprep.subr.mxu0 0.0
        %724 = vmatpush1.msra.mxu0 0.0
        %725 = vmatprep.subr.mxu0 0.0
        %726 = vmatpush1.msra.mxu0 0.0
        %727 = vmatprep.subr.mxu0 0.0
        %728 = vmatpush1.msra.mxu0 0.0
        %729 = vmatprep.subr.mxu0 0.0
        %730 = vmatpush1.msra.mxu0 0.0
        %731 = vmatprep.subr.mxu0 0.0
        %732 = vmatpush1.msra.mxu0 0.0
        %733 = vmatprep.subr.mxu0 0.0
        %734 = vmatpush1.msra.mxu0 0.0
        %735 = vmatprep.subr.mxu0 0.0
        %736 = vmatpush1.msra.mxu0 0.0
        %737 = vmatprep.subr.mxu0 0.0
        %738 = vmatpush1.msra.mxu0 0.0
        %739 = vmatprep.subr.mxu0 0.0
        %740 = vmatpush1.msra.mxu0 0.0
        %741 = vmatprep.subr.mxu0 0.0
        %742 = vmatpush1.msra.mxu0 %v347
        %743 = vmatprep.subr.mxu0 0.0
        %744 = vmatpush1.msra.mxu0 %v342
        %745 = vmatprep.subr.mxu0 0.0
        %746 = vmatpush2.msra.mxu0 0.0
        %747 = vmatprep.subr.mxu0 0.0
        %748 = vmatpush2.msra.mxu0 0.0
        %749 = vmatprep.subr.mxu0 0.0
        %750 = vmatpush2.msra.mxu0 0.0
        %751 = vmatprep.subr.mxu0 0.0
        %752 = vmatpush2.msra.mxu0 0.0
        %753 = vmatprep.subr.mxu0 0.0
        %754 = vmatpush2.msra.mxu0 0.0
        %755 = vmatprep.subr.mxu0 0.0
        %756 = vmatpush2.msra.mxu0 0.0
        %757 = vmatprep.subr.mxu0 0.0
        %758 = vmatpush2.msra.mxu0 0.0
        %759 = vmatprep.subr.mxu0 0.0
        %760 = vmatpush2.msra.mxu0 0.0
        %761 = vmatprep.subr.mxu0 0.0
        %762 = vmatpush2.msra.mxu0 0.0
        %763 = vmatprep.subr.mxu0 0.0
        %764 = vmatpush2.msra.mxu0 0.0
        %765 = vmatprep.subr.mxu0 0.0
        %766 = vmatpush2.msra.mxu0 0.0
        %767 = vmatprep.subr.mxu0 0.0
        %768 = vmatpush2.msra.mxu0 0.0
        %769 = vmatprep.subr.mxu0 0.0
        %770 = vmatpush2.msra.mxu0 0.0
        %771 = vmatprep.subr.mxu0 0.0
        %772 = vmatpush2.msra.mxu0 0.0
        %773 = vmatprep.subr.mxu0 0.0
        %774 = vmatpush2.msra.mxu0 0.0
        %775 = vmatprep.subr.mxu0 0.0
        %776 = vmatpush2.msra.mxu0 0.0
        %777 = vmatprep.mubr.f32.mxu0 0.0
        %778 = vmatmul.mubr.f32.gmra.mxu0 %v352
        %v779 = vpop.f32.mrf.mxu0
        %v780 = vadd.f32 0.0, %v779
        %v781 = vpop.f32.mrf.mxu0
        %782 = vdwg.mxu0
        %s783 = scalar_lea.vmem %s164, 40 [#allocation2]
        %784 = vst.msk [vmem:[%s783] sm:$0xff] %vm350, %v780
        %s785 = sand.u32 %s93, 1
        %s786 = scalar_lea.sflag [#allocation3], %s785
        %s787 = sand.u32 %s93, 1
        %s788 = smul.addr %s787, 48
        %s789 = scalar_lea.vmem [#allocation2], %s788
        // Predicated region
        $region33: #{tpu_custom_call.1} parent=31 // pred_check
          %p790 = pneg %p103
        $region34: #{tpu_custom_call.1} parent=31 // pred_check_branch
          %792 = sbr.rel (%p790) target = $region36
        $region35: #{tpu_custom_call.1} parent=31 // pred_region
          %s793 = smul.u32 6, %s17
          %s795 = ssub.s32 768, 768
          %796 = vsyncadd %s786, %s795
          %s797 = smul.addr %s793, 128
          %s798 = scalar_lea.hbm %s3, %s797
          %s799 = sshll.u32 %s789, 4
          %s800 = int_to_ptr.vmem [resolvable:$true] %s799
          %805 = dma.vmem_to_hbm [thread:$0]  %s800, 768, %s798, %s786, 128, 128, 8
        $region36: #{tpu_custom_call.1} parent=31 // pred_fallthru
          _
      $region32: #{tpu_custom_call.1} parent=5 // pred_fallthru
        _
      %p806 = scmp.le.s32.totalorder 2, %s12
      // Predicated region
      $region37: #{tpu_custom_call.1} parent=5 // pred_check
        %p807 = pneg %p806
      $region38: #{tpu_custom_call.1} parent=5 // pred_check_branch
        %809 = sbr.rel (%p807) target = $region40
      $region39: #{tpu_custom_call.1} parent=5 // pred_region
        %s810 = ssub.s32 %s12, 2
        // Predicated region
        $region41: #{tpu_custom_call.1} parent=39 // pred_check
          %p811 = pneg %p109
        $region42: #{tpu_custom_call.1} parent=39 // pred_check_branch
          %813 = sbr.rel (%p811) target = $region44
        $region43: #{tpu_custom_call.1} parent=39 // pred_region
          %s814 = sand.u32 %s94, 1
          %s815 = scalar_lea.sflag [#allocation3], %s814
          %s816 = sand.u32 %s94, 1
          %s817 = smul.addr %s816, 48
          %s818 = scalar_lea.vmem [#allocation2], %s817
          %819 = dma.done %s815, 768
        $region44: #{tpu_custom_call.1} parent=39 // pred_fallthru
          _
      $region40: #{tpu_custom_call.1} parent=5 // pred_fallthru
        _
    $region6: #{tpu_custom_call.1} parent=1 // loop_footer
      %s16 = sadd.s32 1, %s12
    $region7: #{tpu_custom_call.1} parent=1 // loop_footer_branch
      %11 = sbr.rel target = $region3
    $region8: #{tpu_custom_call.1} parent=1 // loop_exit
      _
    %820 = vsyncpa [#allocation3], 1
    %s821 = scalar_lea.sflag [#allocation3], 1
    %822 = vsyncpa %s821, 1

</llo_original>
